<compile_context>
chip_gen: v7x
topology: tpu7x:2x2x1
jax: 0.10.0
libtpu: 0.0.40
codegen_flags: <defaults>
</compile_context>

<pallas_src>
import jax
import jax.numpy as jnp
from jax.experimental import pallas as pl
from jax.experimental.pallas import tpu as pltpu


def _identity_copy_kernel(x_ref, o_ref):
    # Generator.forward is `return x` -> pure tile copy.
    o_ref[...] = x_ref[...]


_LANE_CHOICES = (1024, 512, 256, 128)      # lane-dense last dims (full vst)
_TARGET_BLOCK_BYTES = 8 * 1024 * 1024      # ~8 MiB per-buffer tile
_VMEM_LIMIT_BYTES = 64 * 1024 * 1024       # 2 in + 2 out x 8 MiB = 32 MiB used
_MIN_DUAL_CORE_ROWS = 64                   # split across 2 TCs above this


def generator_forward(x):
    """Generator.forward(x) == x.  Identity: zero HBM traffic, zero launches."""
    return x


def _round_up(v, m):
    return ((v + m - 1) // m) * m


@jax.jit
def pallas_identity_copy(x):
    """Elementwise-copy template for Generator.forward via a Pallas kernel.

    Lane-dense tiled HBM->VMEM->HBM copy.  Shapes whose element count has no
    128-multiple factorization take the identity fast path instead of paying
    for a padded copy.
    """
    n = x.size
    if n == 0:
        return x

    lanes = next((l for l in _LANE_CHOICES if n % l == 0), None)
    if lanes is None:
        # No lane-dense factorization without a padding copy -> identity.
        return x

    itemsize = jnp.dtype(x.dtype).itemsize
    rows = n // lanes
    x2d = x.reshape(rows, lanes)           # metadata-only under jit

    # Largest block (rows a multiple of 32) keeping per-buffer tiles ~8 MiB.
    max_rows = max(32, (_TARGET_BLOCK_BYTES // (lanes * itemsize)) // 32 * 32)

    if rows <= _MIN_DUAL_CORE_ROWS:
        # Small: single full-extent block (allowed by the (8,128) rule).
        block_rows = rows
    else:
        # At least 2 programs so both v7x TensorCores get work; blocks are a
        # multiple of 32 rows so the trailing partial block stays legal.
        target = min(max_rows, _round_up(pl.cdiv(rows, 2), 32))
        block_rows = min(target, rows)

    grid = (pl.cdiv(rows, block_rows),)

    out = pl.pallas_call(
        _identity_copy_kernel,
        out_shape=jax.ShapeDtypeStruct((rows, lanes), x.dtype),
        grid=grid,
        in_specs=[pl.BlockSpec((block_rows, lanes), lambda i: (i, 0))],
        out_specs=pl.BlockSpec((block_rows, lanes), lambda i: (i, 0)),
        compiler_params=pltpu.CompilerParams(
            dimension_semantics=("parallel",),
            vmem_limit_bytes=_VMEM_LIMIT_BYTES,
        ),
    )(x2d)

    return out.reshape(x.shape)


if __name__ == "__main__":
    key = jax.random.PRNGKey(0)
    k1, k2, k3 = jax.random.split(key, 3)

    # 1) Module-sized NCHW tensor -> runs the Pallas kernel (rows=2, lanes=1024).
    x_small = jax.random.normal(k1, (2, 4, 16, 16), dtype=jnp.float32)
    y_small = jax.block_until_ready(pallas_identity_copy(x_small))
    assert y_small.shape == x_small.shape and y_small.dtype == x_small.dtype
    assert bool(jnp.array_equal(y_small, x_small))

    # Optimized forward path: pure identity (no kernel launch).
    y_fast = jax.block_until_ready(generator_forward(x_small))
    assert bool(jnp.array_equal(y_fast, x_small))

    # 2) Larger tensor -> grid of 2 programs (both TensorCores on v7x).
    x_large = jax.random.normal(k2, (8, 4, 128, 256), dtype=jnp.float32)
    y_large = jax.block_until_ready(pallas_identity_copy(x_large))
    assert y_large.shape == x_large.shape and y_large.dtype == x_large.dtype
    assert bool(jnp.array_equal(y_large, x_large))

    # 3) Ragged element count -> identity fast path (no padded copy).
    x_ragged = jax.random.normal(k3, (3, 5, 37, 33), dtype=jnp.float32)
    y_ragged = jax.block_until_ready(pallas_identity_copy(x_ragged))
    assert y_ragged.shape == x_ragged.shape and y_ragged.dtype == x_ragged.dtype
    assert bool(jnp.array_equal(y_ragged, x_ragged))

    print("KERNEL_OK")
</pallas_src>

<mosaic_0001>
module attributes {stable_mosaic.version = 11 : i64} {
  func.func @_identity_copy_kernel(%arg0: i32, %arg1: memref<2x1024xf32, #tpu.memory_space<vmem>>, %arg2: memref<2x1024xf32, #tpu.memory_space<vmem>>) attributes {dimension_semantics = [#tpu.dimension_semantics<parallel>], iteration_bounds = array<i64: 1>, scalar_prefetch = 0 : i64, scratch_operands = 0 : i64, tpu.core_type = #tpu.core_type<tc>, window_params = [{transform_indices = @transform_0, window_bounds = array<i64: 2, 1024>}, {transform_indices = @transform_1, window_bounds = array<i64: 2, 1024>}]} {
    %c0 = arith.constant 0 : index
    %c0_0 = arith.constant 0 : index
    %0 = vector.load %arg1[%c0, %c0_0] : memref<2x1024xf32, #tpu.memory_space<vmem>>, vector<2x1024xf32>
    %c0_1 = arith.constant 0 : index
    %c0_2 = arith.constant 0 : index
    %1 = vector.load %arg2[%c0_1, %c0_2] : memref<2x1024xf32, #tpu.memory_space<vmem>>, vector<2x1024xf32>
    tpu.vector_store %arg2[%c0_1, %c0_2], %0 {strides = array<i32>} : memref<2x1024xf32, #tpu.memory_space<vmem>>, vector<2x1024xf32>,
    return
  }
  func.func @transform_0(%arg0: i32) -> (i32, i32) {
    %c0_i32 = arith.constant 0 : i32
    %c0_i32_0 = arith.constant 0 : i32
    return %arg0, %c0_i32 : i32, i32
  }
  func.func @transform_1(%arg0: i32) -> (i32, i32) {
    %c0_i32 = arith.constant 0 : i32
    %c0_i32_0 = arith.constant 0 : i32
    return %arg0, %c0_i32 : i32, i32
  }
}

</mosaic_0001>

<llo_original>
// kernel: pallas_identity_copy.1
$region0: #{pallas_identity_copy.1}
  #allocation0 [shape = 'u32[]', space=smem, size = 0x4, offset = 0x4, fixed_abs, tag = 'smem constant byte address 0x4 - core index']
  #allocation1 [shape = 'u32[144,128]{1,0:T(1,128)}', space=vmem, size = 0x12000, scoped, tag = 'internal scratch']
  %s0 = inlined_call_operand.hbm [shape: f32[2,1024], index: 0, kind: input, shape index: {}]
  %s1 = inlined_call_operand.hbm [shape: f32[2,1024], index: 1, kind: output, shape index: {}]
  %s2 = sld [smem:[#allocation0]]
  $region18: #{pallas_identity_copy.1} parent=0
    _
  %s4 = ssub.s32 1, %s2
  %s5 = scalar_select 0, %s4, %s2
  $region1: #{pallas_identity_copy.1} parent=0
    #allocation2 [shape = 'u8[8192]{0}', space=vmem, size = 0x2000, scoped, tag = 'input window, operand 0, single buffered']
    #allocation3 [shape = 's32[1]{0}', space=sflag, size = 0x4, scoped, tag = 'scoped memory for pallas_identity_copy.1']
    #allocation4 [shape = 's32[1]{0}', space=sflag, size = 0x4, scoped, tag = 'scoped memory for pallas_identity_copy.1']
    #allocation5 [shape = 'u8[8192]{0}', space=vmem, size = 0x2000, scoped, tag = 'output window, operand 0, single buffered']
    %6 = vsyncpa [#allocation3], 0
    %7 = vsyncpa [#allocation4], 0
    // Predicated region
    $region2: #{pallas_identity_copy.1} parent=1 // pred_check
      _
    $region3: #{pallas_identity_copy.1} parent=1 // pred_check_branch
      %9 = sbr.rel (0) target = $region5
    $region4: #{pallas_identity_copy.1} parent=1 // pred_region
      %s11 = ssub.s32 256, 256
      %12 = vsyncadd [#allocation3], %s11
      %s14 = sshll.u32 [#allocation2], 4
      %s15 = int_to_ptr.vmem [resolvable:$true] %s14
      %17 = dma.hbm_to_vmem [thread:$0]  %s0, 256, %s15, [#allocation3]
    $region5: #{pallas_identity_copy.1} parent=1 // pred_fallthru
      _
    // Predicated region
    $region6: #{pallas_identity_copy.1} parent=1 // pred_check
      _
    $region7: #{pallas_identity_copy.1} parent=1 // pred_check_branch
      %19 = sbr.rel (0) target = $region9
    $region8: #{pallas_identity_copy.1} parent=1 // pred_region
      %20 = dma.done [#allocation3], 256
    $region9: #{pallas_identity_copy.1} parent=1 // pred_fallthru
      _
    %v21 = vld [vmem:[#allocation2] sm:$0xff]
    %v22 = vld [vmem:[#allocation2 + $0x8] sm:$0xff]
    %23 = vst [vmem:[#allocation5] sm:$0xff] %v21
    %24 = vst [vmem:[#allocation5 + $0x8] sm:$0xff] %v22
    // Predicated region
    $region10: #{pallas_identity_copy.1} parent=1 // pred_check
      _
    $region11: #{pallas_identity_copy.1} parent=1 // pred_check_branch
      %26 = sbr.rel (0) target = $region13
    $region12: #{pallas_identity_copy.1} parent=1 // pred_region
      %s28 = ssub.s32 256, 256
      %29 = vsyncadd [#allocation4], %s28
      %s31 = sshll.u32 [#allocation5], 4
      %s32 = int_to_ptr.vmem [resolvable:$true] %s31
      %34 = dma.vmem_to_hbm [thread:$0]  %s32, 256, %s1, [#allocation4]
    $region13: #{pallas_identity_copy.1} parent=1 // pred_fallthru
      _
    // Predicated region
    $region14: #{pallas_identity_copy.1} parent=1 // pred_check
      _
    $region15: #{pallas_identity_copy.1} parent=1 // pred_check_branch
      %36 = sbr.rel (0) target = $region17
    $region16: #{pallas_identity_copy.1} parent=1 // pred_region
      %37 = dma.done [#allocation4], 256
    $region17: #{pallas_identity_copy.1} parent=1 // pred_fallthru
      _
    %38 = vsyncpa [#allocation3], 1
    %39 = vsyncpa [#allocation4], 1

</llo_original>
